<compile_context>
chip_gen: v6e
topology: v6e:2x2x1
jax: 0.10.0
libtpu: 0.0.40
codegen_flags: <defaults>
</compile_context>

<pallas_src>
import functools

import jax
import jax.numpy as jnp
from jax.experimental import pallas as pl
from jax.experimental.pallas import tpu as pltpu


def _pick_tile(L, target):
    """Largest multiple-of-8 divisor of L that is <= target (or L itself)."""
    if L <= target:
        return L
    for t in range(target, 7, -8):
        if L % t == 0:
            return t
    return L


def _vmem_budget_and_tile_target():
    """Per-generation VMEM request (with headroom) and q-tile target."""
    cap = 128 * 1024 * 1024
    try:
        cap = int(getattr(pltpu.get_tpu_info(), "vmem_capacity_bytes", cap))
    except Exception:  # interpret mode / older runtimes: assume a 128 MiB part
        pass
    if cap <= 64 * 1024 * 1024:           # v7x: leave room for f32 score temps
        return cap - 12 * 1024 * 1024, 256
    return min(cap - 24 * 1024 * 1024, 104 * 1024 * 1024), 512


def _rotate(x, half, use_roll):
    # concat([x2, x1]); the sign of the original rotate_half is folded into sin.
    if use_roll:
        return pltpu.roll(x, shift=half, axis=-1)
    return jnp.concatenate([x[:, half:], x[:, :half]], axis=-1)


# ---------------------------------------------------------------------------
# Pre-pass: post-RoPE K = RoPE(hidden @ Wk^T) -> [B, num_kv, L, hd].
# ---------------------------------------------------------------------------
def _k_rope_kernel(h_ref, wk_ref, cos_ref, sin_ref, k_ref, *, half, use_roll):
    k = jnp.dot(h_ref[...], wk_ref[...], preferred_element_type=jnp.float32)
    k_ref[...] = (k * cos_ref[...]
                  + _rotate(k, half, use_roll) * sin_ref[...]).astype(k_ref.dtype)


def _k_rope_prepass(hidden_c, wk_g, cos, sin_signed, *, head_dim, tl, use_roll,
                    vmem_limit):
    B, L, D = hidden_c.shape
    num_kv = wk_g.shape[0]
    kernel = functools.partial(_k_rope_kernel, half=head_dim // 2,
                               use_roll=use_roll)
    return pl.pallas_call(
        kernel,
        out_shape=jax.ShapeDtypeStruct((B, num_kv, L, head_dim), hidden_c.dtype),
        grid_spec=pltpu.PrefetchScalarGridSpec(
            num_scalar_prefetch=0,
            # kv-head innermost: the (tl, D) hidden tile is DMA'd once per (b, lt)
            grid=(B, L // tl, num_kv),
            in_specs=[
                pl.BlockSpec((None, tl, D), lambda b, lt, g: (b, lt, 0)),
                pl.BlockSpec((None, D, head_dim), lambda b, lt, g: (g, 0, 0)),
                pl.BlockSpec((tl, head_dim), lambda b, lt, g: (lt, 0)),
                pl.BlockSpec((tl, head_dim), lambda b, lt, g: (lt, 0)),
            ],
            out_specs=pl.BlockSpec((None, None, tl, head_dim),
                                   lambda b, lt, g: (b, g, lt, 0)),
        ),
        compiler_params=pltpu.CompilerParams(
            dimension_semantics=("parallel", "parallel", "parallel"),
            vmem_limit_bytes=vmem_limit),
    )(hidden_c, wk_g, cos, sin_signed)


# ---------------------------------------------------------------------------
# Main kernel: grouped Q projection + RoPE, scores, row softmax.
# ---------------------------------------------------------------------------
def _attn_weights_kernel(h_ref, wq_ref, k_ref, cos_ref, sin_ref, o_ref, *,
                         expand, head_dim, use_roll):
    # h_ref:   (tq, D)          hidden tile (matmul dtype)
    # wq_ref:  (D, expand*hd)   q-projection for the whole GQA group
    # k_ref:   (L, hd)          post-RoPE K for kv-head g (matmul dtype)
    # cos_ref/sin_ref: (tq, hd) f32 (sin pre-signed)
    # o_ref:   (expand, tq, L)  softmax(q k^T) for heads g*expand .. g*expand+expand-1
    half = head_dim // 2
    q_group = jnp.dot(h_ref[...], wq_ref[...],
                      preferred_element_type=jnp.float32)   # [tq, expand*hd] f32
    cos_q = cos_ref[...]
    sin_q = sin_ref[...]
    k = k_ref[...]
    out_bf16 = (o_ref.dtype == jnp.bfloat16)

    # TODO(synk): optionally stack the `expand` heads along M into a single
    # [expand*tq, hd] x [hd, L] matmul if the relayout proves cheaper in the
    # bundle dump (review flagged this as a modest, conditional win).
    for hh in range(expand):                                  # static unroll (small)
        q_h = q_group[:, hh * head_dim:(hh + 1) * head_dim]   # [tq, hd] f32
        q_h = q_h * cos_q + _rotate(q_h, half, use_roll) * sin_q   # RoPE in f32
        # Contract last dims directly -- no explicit k.T materialization; bf16
        # MXU operands, f32 accumulation.
        scores = jax.lax.dot_general(
            q_h.astype(k.dtype), k,
            dimension_numbers=(((1,), (1,)), ((), ())),
            preferred_element_type=jnp.float32)               # [tq, L] f32
        m = jnp.max(scores, axis=-1, keepdims=True)
        e = jnp.exp(scores - m)
        inv = pl.reciprocal(jnp.sum(e, axis=-1, keepdims=True), approx=True)
        if out_bf16:   # bf16 epilogue: 2 elems / 32-bit lane on v6e/v7x VPU
            probs = e.astype(jnp.bfloat16) * inv.astype(jnp.bfloat16)
        else:
            probs = e * inv
        o_ref[hh] = probs.astype(o_ref.dtype)


def gemma_attention_weights(hidden, wq_pt, wk_pt, cos, sin, attn_mask=None, *,
                            head_dim, tq=None, matmul_dtype=jnp.bfloat16,
                            out_dtype=None):
    """hidden [B,L,D]; wq_pt [num_q*hd, D]; wk_pt [num_kv*hd, D] (PyTorch layout).

    cos/sin: [L, head_dim] (or [B, L, head_dim]; assumed identical across batch).
    attn_mask is accepted but unused -- the reference module never applies it.
    MXU operands are cast to `matmul_dtype` (bf16 default for the native MXU path
    on all generations; pass jnp.float32 for bit-closer parity with an f32 ref).
    Returns attention weights [B, num_q, L, L] in `out_dtype` (default hidden.dtype).
    """
    del attn_mask  # interface parity only; the reference forward ignores it
    B, L, D = hidden.shape
    num_q = wq_pt.shape[0] // head_dim
    num_kv = wk_pt.shape[0] // head_dim
    expand = num_q // num_kv
    assert num_kv * expand == num_q, "num_q must be a multiple of num_kv (GQA)"
    out_dtype = hidden.dtype if out_dtype is None else out_dtype

    if cos.ndim == 3:  # [B, L, hd]: standard position_ids are batch-invariant.
        # TODO(synk): per-batch position_ids (packed/padded sequences) would need
        # cos/sin kept 3-D with a b-indexed BlockSpec; batch 0 is used here.
        cos, sin = cos[0], sin[0]
    half = head_dim // 2
    cos = cos.astype(jnp.float32)
    # Fold rotate_half's negation into sin so the kernels only need a rotation.
    sin_signed = jnp.concatenate([-sin[:, :half], sin[:, half:]],
                                 axis=-1).astype(jnp.float32)

    vmem_limit, tq_target = _vmem_budget_and_tile_target()
    if tq is None:
        tq = _pick_tile(L, tq_target)
    assert L % tq == 0
    n_qt = L // tq
    use_roll = (head_dim % 128 == 0)   # Gemma hd=256 -> XLU roll; toy hd<128 -> concat

    # PyTorch Linear: y = x @ W^T.  Group W^T columns per kv-head:
    #   wq_g: [num_kv, D, expand*hd]  (q-heads of one group are consecutive)
    #   wk_g: [num_kv, D, hd]
    wq_g = jnp.transpose(wq_pt.T.reshape(D, num_kv, expand * head_dim),
                         (1, 0, 2)).astype(matmul_dtype)
    wk_g = jnp.transpose(wk_pt.T.reshape(D, num_kv, head_dim),
                         (1, 0, 2)).astype(matmul_dtype)
    hidden_c = hidden.astype(matmul_dtype)

    # Pre-pass: post-RoPE K to HBM (tens of MiB) -- removes the per-(b,g) K
    # recompute/carry from the main kernel and lets hidden stream as (tq, D) tiles.
    k_rope = _k_rope_prepass(hidden_c, wk_g, cos, sin_signed, head_dim=head_dim,
                             tl=tq, use_roll=use_roll, vmem_limit=vmem_limit)

    kernel = functools.partial(_attn_weights_kernel, expand=expand,
                               head_dim=head_dim, use_roll=use_roll)

    in_bytes = jnp.dtype(matmul_dtype).itemsize
    out_bytes = jnp.dtype(out_dtype).itemsize
    cost = pl.CostEstimate(
        flops=(2 * B * L * D * num_q * head_dim          # q projection
               + 2 * B * num_q * L * L * head_dim),      # scores
        transcendentals=B * num_q * L * L,               # exp
        bytes_accessed=(B * num_kv * L * D * in_bytes    # hidden (re-read per group)
                        + num_q * head_dim * D * in_bytes
                        + B * num_kv * L * head_dim * in_bytes
                        + B * num_q * L * L * out_bytes))

    out = pl.pallas_call(
        kernel,
        out_shape=jax.ShapeDtypeStruct((B, num_q, L, L), out_dtype),
        grid_spec=pltpu.PrefetchScalarGridSpec(
            num_scalar_prefetch=0,
            grid=(B, num_kv, n_qt),
            in_specs=[
                # hidden streamed as (tq, D) tiles -> fits v7x's 64 MiB VMEM
                pl.BlockSpec((None, tq, D), lambda b, g, qt: (b, qt, 0)),
                # per-group Q weights / post-RoPE K: constant across qt (DMA'd
                # once per (b, g) by the pipeline)
                pl.BlockSpec((None, D, expand * head_dim),
                             lambda b, g, qt: (g, 0, 0)),
                pl.BlockSpec((None, None, L, head_dim),
                             lambda b, g, qt: (b, g, 0, 0)),
                pl.BlockSpec((tq, head_dim), lambda b, g, qt: (qt, 0)),
                pl.BlockSpec((tq, head_dim), lambda b, g, qt: (qt, 0)),
            ],
            # lane-dense output blocks: last dim is the full L
            out_specs=pl.BlockSpec((None, expand, tq, L),
                                   lambda b, g, qt: (b, g, qt, 0)),
        ),
        compiler_params=pltpu.CompilerParams(
            # No carries after the K pre-pass: every grid axis is parallel.
            dimension_semantics=("parallel", "parallel", "parallel"),
            vmem_limit_bytes=vmem_limit),
        cost_estimate=cost,
    )(hidden_c, wq_g, k_rope, cos, sin_signed)
    return out


def _reference(hidden, wq_pt, wk_pt, cos, sin, head_dim):
    """Pure-JAX (f32) replica of the PyTorch forward, for verification."""
    B, L, D = hidden.shape
    num_q = wq_pt.shape[0] // head_dim
    num_kv = wk_pt.shape[0] // head_dim
    expand = num_q // num_kv
    q = (hidden @ wq_pt.T).reshape(B, L, num_q, head_dim).transpose(0, 2, 1, 3)
    k = (hidden @ wk_pt.T).reshape(B, L, num_kv, head_dim).transpose(0, 2, 1, 3)
    cos_b, sin_b = cos[None, None], sin[None, None]

    def rot(x):
        h = x.shape[-1] // 2
        return jnp.concatenate([-x[..., h:], x[..., :h]], axis=-1)

    q = q * cos_b + rot(q) * sin_b
    k = k * cos_b + rot(k) * sin_b
    k = jnp.repeat(k, expand, axis=1)
    scores = q @ jnp.swapaxes(k, -1, -2)
    return jax.nn.softmax(scores, axis=-1)


if __name__ == "__main__":
    B, L, D = 2, 8, 32
    head_dim, num_q, num_kv = 16, 4, 2

    key = jax.random.PRNGKey(0)
    k1, k2, k3 = jax.random.split(key, 3)
    hidden = jax.random.normal(k1, (B, L, D), jnp.float32)
    wq_pt = jax.random.normal(k2, (num_q * head_dim, D), jnp.float32) * 0.05
    wk_pt = jax.random.normal(k3, (num_kv * head_dim, D), jnp.float32) * 0.05

    # Gemma-style rotary embeddings (shared across the batch: [L, head_dim]).
    inv_freq = 1.0 / (10000.0 ** (jnp.arange(0, head_dim, 2, dtype=jnp.float32)
                                  / head_dim))
    pos = jnp.arange(L, dtype=jnp.float32)
    freqs = pos[:, None] * inv_freq[None, :]            # [L, head_dim // 2]
    emb = jnp.concatenate([freqs, freqs], axis=-1)      # [L, head_dim]
    cos = jnp.cos(emb).astype(jnp.float32)
    sin = jnp.sin(emb).astype(jnp.float32)

    # Causal mask -- passed for interface parity, unused by the module.
    attn_mask = jnp.where(jnp.tril(jnp.ones((L, L), bool)), 0.0,
                          -jnp.inf)[None, None]

    out = gemma_attention_weights(hidden, wq_pt, wk_pt, cos, sin, attn_mask,
                                  head_dim=head_dim)
    out = jax.block_until_ready(out)

    ref = _reference(hidden, wq_pt, wk_pt, cos, sin, head_dim)
    assert out.shape == (B, num_q, L, L), out.shape
    # bf16 MXU operands + approx reciprocal -> ~1e-3-level error on probabilities.
    assert jnp.allclose(out, ref, atol=2e-2, rtol=0.0), \
        float(jnp.max(jnp.abs(out - ref)))
    assert jnp.allclose(jnp.sum(out, axis=-1), 1.0, atol=2e-2)
    print("KERNEL_OK")
</pallas_src>

<mosaic_0001>
module attributes {stable_mosaic.version = 11 : i64} {
  func.func @_k_rope_kernel(%arg0: i32, %arg1: i32, %arg2: i32, %arg3: memref<1x8x32xbf16, #tpu.memory_space<vmem>>, %arg4: memref<1x32x16xbf16, #tpu.memory_space<vmem>>, %arg5: memref<8x16xf32, #tpu.memory_space<vmem>>, %arg6: memref<8x16xf32, #tpu.memory_space<vmem>>, %arg7: memref<1x1x8x16xbf16, #tpu.memory_space<vmem>>) attributes {dimension_semantics = [#tpu.dimension_semantics<parallel>, #tpu.dimension_semantics<parallel>, #tpu.dimension_semantics<parallel>], iteration_bounds = array<i64: 2, 1, 2>, scalar_prefetch = 0 : i64, scratch_operands = 0 : i64, tpu.core_type = #tpu.core_type<tc>, window_params = [{transform_indices = @transform_0, window_bounds = array<i64: 1, 8, 32>}, {transform_indices = @transform_1, window_bounds = array<i64: 1, 32, 16>}, {transform_indices = @transform_2, window_bounds = array<i64: 8, 16>}, {transform_indices = @transform_3, window_bounds = array<i64: 8, 16>}, {transform_indices = @transform_4, window_bounds = array<i64: 1, 1, 8, 16>}]} {
    %c0 = arith.constant 0 : index
    %c0_0 = arith.constant 0 : index
    %c0_1 = arith.constant 0 : index
    %0 = vector.load %arg3[%c0, %c0_0, %c0_1] : memref<1x8x32xbf16, #tpu.memory_space<vmem>>, vector<1x8x32xbf16>
    %1 = vector.shape_cast %0 : vector<1x8x32xbf16> to vector<8x32xbf16>
    %c0_2 = arith.constant 0 : index
    %c0_3 = arith.constant 0 : index
    %c0_4 = arith.constant 0 : index
    %2 = vector.load %arg4[%c0_2, %c0_3, %c0_4] : memref<1x32x16xbf16, #tpu.memory_space<vmem>>, vector<1x32x16xbf16>
    %3 = vector.shape_cast %2 : vector<1x32x16xbf16> to vector<32x16xbf16>
    %cst = arith.constant dense<0.000000e+00> : vector<8x16xf32>
    %4 = tpu.matmul %1, %3, %cst {dimension_numbers = #tpu.dot_dimension_numbers<[1], [0], [0], [1], [0, 0, 1, 1], [], []>} : vector<8x32xbf16>, vector<32x16xbf16>, vector<8x16xf32> -> vector<8x16xf32>
    %c0_5 = arith.constant 0 : index
    %c0_6 = arith.constant 0 : index
    %5 = vector.load %arg5[%c0_5, %c0_6] : memref<8x16xf32, #tpu.memory_space<vmem>>, vector<8x16xf32>
    %6 = arith.mulf %4, %5 : vector<8x16xf32>
    %7 = vector.extract_strided_slice %4 {offsets = [0, 8], sizes = [8, 8], strides = [1, 1]} : vector<8x16xf32> to vector<8x8xf32>
    %8 = vector.extract_strided_slice %4 {offsets = [0, 0], sizes = [8, 8], strides = [1, 1]} : vector<8x16xf32> to vector<8x8xf32>
    %9 = tpu.concatenate %7, %8 in 1 : vector<8x8xf32>, vector<8x8xf32> -> vector<8x16xf32>
    %c0_7 = arith.constant 0 : index
    %c0_8 = arith.constant 0 : index
    %10 = vector.load %arg6[%c0_7, %c0_8] : memref<8x16xf32, #tpu.memory_space<vmem>>, vector<8x16xf32>
    %11 = arith.mulf %9, %10 : vector<8x16xf32>
    %12 = arith.addf %6, %11 : vector<8x16xf32>
    %13 = arith.truncf %12 : vector<8x16xf32> to vector<8x16xbf16>
    %c0_9 = arith.constant 0 : index
    %c0_10 = arith.constant 0 : index
    %c0_11 = arith.constant 0 : index
    %c0_12 = arith.constant 0 : index
    %14 = vector.load %arg7[%c0_9, %c0_10, %c0_11, %c0_12] : memref<1x1x8x16xbf16, #tpu.memory_space<vmem>>, vector<1x1x8x16xbf16>
    %15 = vector.shape_cast %14 : vector<1x1x8x16xbf16> to vector<8x16xbf16>
    %16 = vector.shape_cast %13 : vector<8x16xbf16> to vector<1x1x8x16xbf16>
    tpu.vector_store %arg7[%c0_9, %c0_10, %c0_11, %c0_12], %16 {strides = array<i32>} : memref<1x1x8x16xbf16, #tpu.memory_space<vmem>>, vector<1x1x8x16xbf16>,
    return
  }
  func.func @transform_0(%arg0: i32, %arg1: i32, %arg2: i32) -> (i32, i32, i32) {
    %c0_i32 = arith.constant 0 : i32
    %c0_i32_0 = arith.constant 0 : i32
    return %arg0, %arg1, %c0_i32 : i32, i32, i32
  }
  func.func @transform_1(%arg0: i32, %arg1: i32, %arg2: i32) -> (i32, i32, i32) {
    %c0_i32 = arith.constant 0 : i32
    %c0_i32_0 = arith.constant 0 : i32
    %c0_i32_1 = arith.constant 0 : i32
    return %arg2, %c0_i32, %c0_i32_0 : i32, i32, i32
  }
  func.func @transform_2(%arg0: i32, %arg1: i32, %arg2: i32) -> (i32, i32) {
    %c0_i32 = arith.constant 0 : i32
    %c0_i32_0 = arith.constant 0 : i32
    return %arg1, %c0_i32 : i32, i32
  }
  func.func @transform_3(%arg0: i32, %arg1: i32, %arg2: i32) -> (i32, i32) {
    %c0_i32 = arith.constant 0 : i32
    %c0_i32_0 = arith.constant 0 : i32
    return %arg1, %c0_i32 : i32, i32
  }
  func.func @transform_4(%arg0: i32, %arg1: i32, %arg2: i32) -> (i32, i32, i32, i32) {
    %c0_i32 = arith.constant 0 : i32
    %c0_i32_0 = arith.constant 0 : i32
    return %arg0, %arg2, %arg1, %c0_i32 : i32, i32, i32, i32
  }
}

</mosaic_0001>

<llo_original>
// kernel: tpu_custom_call.1
$region0: #{tpu_custom_call.1}
  #allocation0 [shape = 'u32[]', space=smem, size = 0x4, offset = 0x4, fixed_abs, tag = 'smem constant byte address 0x4 - core index']
  #allocation1 [shape = 'u32[144,128]{1,0:T(1,128)}', space=vmem, size = 0x12000, scoped, tag = 'internal scratch']
  %s0 = inlined_call_operand.vmem [shape: bf16[2,8,32], index: 0, kind: input, shape index: {}]
  %s1 = inlined_call_operand.vmem [shape: bf16[2,32,16], index: 1, kind: input, shape index: {}]
  %s2 = inlined_call_operand.vmem [shape: f32[8,16], index: 2, kind: input, shape index: {}]
  %s3 = inlined_call_operand.vmem [shape: f32[8,16], index: 3, kind: input, shape index: {}]
  %s4 = inlined_call_operand.hbm [shape: bf16[2,2,8,16], index: 4, kind: output, shape index: {}]
  %s5 = sld [smem:[#allocation0]]
  $region49: #{tpu_custom_call.1} parent=0
    _
  %s7 = ssub.s32 1, %s5
  %s8 = scalar_select 0, %s7, %s5
  $region1: #{tpu_custom_call.1} parent=0
    #allocation2 [shape = 'u8[4096]{0}', space=vmem, size = 0x1000, scoped, tag = 'output window, operand 0']
    #allocation3 [shape = 's32[2]{0}', space=sflag, size = 0x8, scoped, tag = 'scoped memory for tpu_custom_call.1']
    %9 = vsyncpa [#allocation3], 0
    %s10 = scalar_lea.sflag [#allocation3], 1
    %11 = vsyncpa %s10, 0
    loop: start=0, step=1, limit=6
    $region2: #{tpu_custom_call.1} parent=1 // loop_pre_header
      _
    $region3: #{tpu_custom_call.1} parent=1 // loop_header
      %s13 = sphi 0, %s17
      %p14 = scmp.ge.s32.totalorder %s13, 6
      %s20 = sphi 0, %s39
      %s21 = sphi 0, %s35
      %s22 = sphi 0, %s31
      %s23 = sphi 0, %s20
      %s24 = sphi 0, %s21
      %s25 = sphi 0, %s22
      %s26 = sphi 0, %s23
      %s27 = sphi 0, %s24
      %s28 = sphi 0, %s25
      %s44 = sphi 0, %s46
      %s47 = sphi 0, %s44
      %s48 = sphi 0, %s47
      %s64 = sphi 0, %s48
      %s70 = sphi 0, %s72
      %s73 = sphi 0, %s70
      %s74 = sphi 0, %s73
      %s90 = sphi 0, %s74
      %s96 = sphi 0, %s98
      %s99 = sphi 0, %s96
      %s100 = sphi 0, %s99
      %s116 = sphi 0, %s100
      %s122 = sphi 0, %s124
      %s125 = sphi 0, %s122
      %s126 = sphi 0, %s125
      %s142 = sphi 0, %s126
      %s152 = sphi 0, %s154
      %s155 = sphi 0, %s152
      %s156 = sphi 0, %s155
      %s172 = sphi 0, %s156
    $region4: #{tpu_custom_call.1} parent=1 // loop_header_branch
      %16 = sbr.rel (%p14) target = $region8
    $region5: #{tpu_custom_call.1} parent=1 // loop_body
      %s18 = ssub.s32 %s13, 1
      %s19 = ssub.s32 %s13, 2
      %s29 = sadd.s32 1, %s22
      %p30 = scmp.ge.s32.totalorder %s29, 2
      %s31 = scalar_select %p30, 0, %s29
      %s32 = sadd.s32 1, %s21
      %s33 = scalar_select %p30, %s32, %s21
      %p34 = scmp.ge.s32.totalorder %s33, 1
      %s35 = scalar_select %p34, 0, %s33
      %s36 = sadd.s32 1, %s20
      %s37 = scalar_select %p34, %s36, %s20
      %p38 = scmp.ge.s32.totalorder %s37, 2
      %s39 = scalar_select %p38, 0, %s37
      %s40 = ssub.s32 %s20, %s39
      %s41 = ssub.s32 %s21, %s35
      %s42 = sor.u32 %s40, %s41
      %p43 = scmp.eq.s32.totalorder %s42, 0
      %s45 = sadd.s32 %s44, 1
      %s46 = scalar_select %p43, %s44, %s45
      %p49 = pneg %p43
      %p50 = scmp.eq.s32.totalorder %s13, 3
      %p51 = por %p49, %p50
      %p52 = scmp.ne.s32.totalorder %s44, %s47
      %p53 = scmp.eq.s32.totalorder %s13, 0
      %p54 = por %p52, %p53
      %p55 = scmp.ne.s32.totalorder %s44, %s47
      %p56 = scmp.eq.s32.totalorder %s18, 3
      %p57 = por %p55, %p56
      %p58 = scmp.ne.s32.totalorder %s47, %s48
      %p59 = scmp.eq.s32.totalorder %s18, 0
      %p60 = por %p58, %p59
      %p61 = scmp.ne.s32.totalorder %s47, %s48
      %p62 = scmp.eq.s32.totalorder %s19, 3
      %p63 = por %p61, %p62
      %p65 = scmp.ne.s32.totalorder %s48, %s64
      %p66 = scmp.eq.s32.totalorder %s19, 0
      %p67 = por %p65, %p66
      %s68 = ssub.s32 %s22, %s31
      %p69 = scmp.eq.s32.totalorder %s68, 0
      %s71 = sadd.s32 %s70, 1
      %s72 = scalar_select %p69, %s70, %s71
      %p75 = pneg %p69
      %p76 = scmp.eq.s32.totalorder %s13, 3
      %p77 = por %p75, %p76
      %p78 = scmp.ne.s32.totalorder %s70, %s73
      %p79 = scmp.eq.s32.totalorder %s13, 0
      %p80 = por %p78, %p79
      %p81 = scmp.ne.s32.totalorder %s70, %s73
      %p82 = scmp.eq.s32.totalorder %s18, 3
      %p83 = por %p81, %p82
      %p84 = scmp.ne.s32.totalorder %s73, %s74
      %p85 = scmp.eq.s32.totalorder %s18, 0
      %p86 = por %p84, %p85
      %p87 = scmp.ne.s32.totalorder %s73, %s74
      %p88 = scmp.eq.s32.totalorder %s19, 3
      %p89 = por %p87, %p88
      %p91 = scmp.ne.s32.totalorder %s74, %s90
      %p92 = scmp.eq.s32.totalorder %s19, 0
      %p93 = por %p91, %p92
      %s94 = ssub.s32 %s21, %s35
      %p95 = scmp.eq.s32.totalorder %s94, 0
      %s97 = sadd.s32 %s96, 1
      %s98 = scalar_select %p95, %s96, %s97
      %p101 = pneg %p95
      %p102 = scmp.eq.s32.totalorder %s13, 3
      %p103 = por %p101, %p102
      %p104 = scmp.ne.s32.totalorder %s96, %s99
      %p105 = scmp.eq.s32.totalorder %s13, 0
      %p106 = por %p104, %p105
      %p107 = scmp.ne.s32.totalorder %s96, %s99
      %p108 = scmp.eq.s32.totalorder %s18, 3
      %p109 = por %p107, %p108
      %p110 = scmp.ne.s32.totalorder %s99, %s100
      %p111 = scmp.eq.s32.totalorder %s18, 0
      %p112 = por %p110, %p111
      %p113 = scmp.ne.s32.totalorder %s99, %s100
      %p114 = scmp.eq.s32.totalorder %s19, 3
      %p115 = por %p113, %p114
      %p117 = scmp.ne.s32.totalorder %s100, %s116
      %p118 = scmp.eq.s32.totalorder %s19, 0
      %p119 = por %p117, %p118
      %s120 = ssub.s32 %s21, %s35
      %p121 = scmp.eq.s32.totalorder %s120, 0
      %s123 = sadd.s32 %s122, 1
      %s124 = scalar_select %p121, %s122, %s123
      %p127 = pneg %p121
      %p128 = scmp.eq.s32.totalorder %s13, 3
      %p129 = por %p127, %p128
      %p130 = scmp.ne.s32.totalorder %s122, %s125
      %p131 = scmp.eq.s32.totalorder %s13, 0
      %p132 = por %p130, %p131
      %p133 = scmp.ne.s32.totalorder %s122, %s125
      %p134 = scmp.eq.s32.totalorder %s18, 3
      %p135 = por %p133, %p134
      %p136 = scmp.ne.s32.totalorder %s125, %s126
      %p137 = scmp.eq.s32.totalorder %s18, 0
      %p138 = por %p136, %p137
      %p139 = scmp.ne.s32.totalorder %s125, %s126
      %p140 = scmp.eq.s32.totalorder %s19, 3
      %p141 = por %p139, %p140
      %p143 = scmp.ne.s32.totalorder %s126, %s142
      %p144 = scmp.eq.s32.totalorder %s19, 0
      %p145 = por %p143, %p144
      %s146 = ssub.s32 %s20, %s39
      %s147 = ssub.s32 %s22, %s31
      %s148 = sor.u32 %s146, %s147
      %s149 = ssub.s32 %s21, %s35
      %s150 = sor.u32 %s148, %s149
      %p151 = scmp.eq.s32.totalorder %s150, 0
      %s153 = sadd.s32 %s152, 1
      %s154 = scalar_select %p151, %s152, %s153
      %p157 = pneg %p151
      %p158 = scmp.eq.s32.totalorder %s13, 3
      %p159 = por %p157, %p158
      %p160 = scmp.ne.s32.totalorder %s152, %s155
      %p161 = scmp.eq.s32.totalorder %s13, 0
      %p162 = por %p160, %p161
      %p163 = scmp.ne.s32.totalorder %s152, %s155
      %p164 = scmp.eq.s32.totalorder %s18, 3
      %p165 = por %p163, %p164
      %p166 = scmp.ne.s32.totalorder %s155, %s156
      %p167 = scmp.eq.s32.totalorder %s18, 0
      %p168 = por %p166, %p167
      %p169 = scmp.ne.s32.totalorder %s155, %s156
      %p170 = scmp.eq.s32.totalorder %s19, 3
      %p171 = por %p169, %p170
      %p173 = scmp.ne.s32.totalorder %s156, %s172
      %p174 = scmp.eq.s32.totalorder %s19, 0
      %p175 = por %p173, %p174
      %p176 = scmp.le.s32.totalorder 1, %s13
      %p177 = scmp.lt.s32.totalorder %s13, 5
      %p178 = pnand %p176, %p177
      %p179 = pneg %p178
      // Predicated region
      $region9: #{tpu_custom_call.1} parent=5 // pred_check
        _
      $region10: #{tpu_custom_call.1} parent=5 // pred_check_branch
        %181 = sbr.rel (%p178) target = $region12
      $region11: #{tpu_custom_call.1} parent=5 // pred_region
        %s182 = ssub.s32 %s13, 1
        // Predicated region
        $region13: #{tpu_custom_call.1} parent=11 // pred_check
          %p183 = pneg %p112
        $region14: #{tpu_custom_call.1} parent=11 // pred_check_branch
          %185 = sbr.rel (%p183) target = $region16
        $region15: #{tpu_custom_call.1} parent=11 // pred_region
          %p186 = scmp.lt.s32.totalorder %s24, 0
          %s187 = scalar_select %p186, %s24, 0
          %s188 = smul.addr %s187, 8
          %s189 = scalar_lea.vmem %s2, %s188
        $region16: #{tpu_custom_call.1} parent=11 // pred_fallthru
          _
        // Predicated region
        $region17: #{tpu_custom_call.1} parent=11 // pred_check
          %p190 = pneg %p138
        $region18: #{tpu_custom_call.1} parent=11 // pred_check_branch
          %192 = sbr.rel (%p190) target = $region20
        $region19: #{tpu_custom_call.1} parent=11 // pred_region
          %p193 = scmp.lt.s32.totalorder %s24, 0
          %s194 = scalar_select %p193, %s24, 0
          %s195 = smul.addr %s194, 8
          %s196 = scalar_lea.vmem %s3, %s195
        $region20: #{tpu_custom_call.1} parent=11 // pred_fallthru
          _
      $region12: #{tpu_custom_call.1} parent=5 // pred_fallthru
        _
      %p197 = scmp.lt.s32.totalorder %s13, 4
      // Predicated region
      $region21: #{tpu_custom_call.1} parent=5 // pred_check
        %p198 = pneg %p197
      $region22: #{tpu_custom_call.1} parent=5 // pred_check_branch
        %200 = sbr.rel (%p198) target = $region24
      $region23: #{tpu_custom_call.1} parent=5 // pred_region
        // Predicated region
        $region25: #{tpu_custom_call.1} parent=23 // pred_check
          %p201 = pneg %p54
        $region26: #{tpu_custom_call.1} parent=23 // pred_check_branch
          %203 = sbr.rel (%p201) target = $region28
        $region27: #{tpu_custom_call.1} parent=23 // pred_region
          %p204 = scmp.lt.s32.totalorder %s20, 1
          %s205 = scalar_select %p204, %s20, 1
          %p206 = scmp.lt.s32.totalorder %s21, 0
          %s207 = scalar_select %p206, %s21, 0
          %s208 = sadd.s32 %s207, %s205
          %s209 = smul.addr %s208, 4
          %s210 = scalar_lea.vmem %s0, %s209
        $region28: #{tpu_custom_call.1} parent=23 // pred_fallthru
          _
        // Predicated region
        $region29: #{tpu_custom_call.1} parent=23 // pred_check
          %p211 = pneg %p80
        $region30: #{tpu_custom_call.1} parent=23 // pred_check_branch
          %213 = sbr.rel (%p211) target = $region32
        $region31: #{tpu_custom_call.1} parent=23 // pred_region
          %p214 = scmp.lt.s32.totalorder %s22, 1
          %s215 = scalar_select %p214, %s22, 1
          %s216 = smul.addr %s215, 4
          %s217 = smul.addr %s216, 4
          %s218 = scalar_lea.vmem %s1, %s217
        $region32: #{tpu_custom_call.1} parent=23 // pred_fallthru
          _
      $region24: #{tpu_custom_call.1} parent=5 // pred_fallthru
        _
      %p219 = scmp.le.s32.totalorder 1, %s13
      %p220 = scmp.lt.s32.totalorder %s13, 5
      %p221 = pnand %p219, %p220
      %p222 = pneg %p221
      // Predicated region
      $region33: #{tpu_custom_call.1} parent=5 // pred_check
        _
      $region34: #{tpu_custom_call.1} parent=5 // pred_check_branch
        %224 = sbr.rel (%p221) target = $region36
      $region35: #{tpu_custom_call.1} parent=5 // pred_region
        %s225 = ssub.s32 %s13, 1
        %p226 = scmp.lt.s32.totalorder %s23, 1
        %s227 = scalar_select %p226, %s23, 1
        %p228 = scmp.lt.s32.totalorder %s24, 0
        %s229 = scalar_select %p228, %s24, 0
        %s230 = sadd.s32 %s229, %s227
        %s231 = smul.addr %s230, 4
        %s232 = scalar_lea.vmem %s0, %s231
        %p233 = pneg %p60
        %p234 = pneg %p57
        %p235 = scmp.lt.s32.totalorder %s25, 1
        %s236 = scalar_select %p235, %s25, 1
        %s237 = smul.addr %s236, 4
        %s238 = smul.addr %s237, 4
        %s239 = scalar_lea.vmem %s1, %s238
        %p240 = pneg %p86
        %p241 = pneg %p83
        %p242 = scmp.lt.s32.totalorder %s24, 0
        %s243 = scalar_select %p242, %s24, 0
        %s244 = smul.addr %s243, 8
        %s245 = scalar_lea.vmem %s2, %s244
        %p246 = pneg %p112
        %p247 = pneg %p109
        %p248 = scmp.lt.s32.totalorder %s24, 0
        %s249 = scalar_select %p248, %s24, 0
        %s250 = smul.addr %s249, 8
        %s251 = scalar_lea.vmem %s3, %s250
        %p252 = pneg %p138
        %p253 = pneg %p135
        %p254 = pneg %p168
        %p255 = pneg %p165
        %s256 = sand.u32 %s155, 1
        %s257 = scalar_lea.sflag [#allocation3], %s256
        %s258 = sand.u32 %s155, 1
        %s259 = smul.addr %s258, 4
        %s260 = scalar_lea.vmem [#allocation2], %s259
        %p261 = scmp.lt.s32.totalorder %s23, 1
        %s262 = scalar_select %p261, %s23, 1
        %p263 = scmp.lt.s32.totalorder %s24, 0
        %s264 = scalar_select %p263, %s24, 0
        %s265 = sadd.s32 %s264, %s262
        %s266 = smul.addr %s265, 4
        %s267 = scalar_lea.vmem %s0, %s266
        %p268 = scmp.lt.s32.totalorder %s25, 1
        %s269 = scalar_select %p268, %s25, 1
        %s270 = smul.addr %s269, 4
        %s271 = smul.addr %s270, 4
        %s272 = scalar_lea.vmem %s1, %s271
        %p273 = scmp.lt.s32.totalorder %s24, 0
        %s274 = scalar_select %p273, %s24, 0
        %s275 = smul.addr %s274, 8
        %s276 = scalar_lea.vmem %s2, %s275
        %p277 = scmp.lt.s32.totalorder %s24, 0
        %s278 = scalar_select %p277, %s24, 0
        %s279 = smul.addr %s278, 8
        %s280 = scalar_lea.vmem %s3, %s279
        %v282 = vld [vmem:[%s267] sm:$0xf]
        %v283 = vld [vmem:[%s272] sm:$0xf]
        %v284 = vld [vmem:[%s272 + $0x4] sm:$0xf]
        %v285 = vld [vmem:[%s272 + $0x8] sm:$0xf]
        %v286 = vld [vmem:[%s272 + $0xc] sm:$0xf]
        %v291 = vunpack.c.l.b16 %v283
        %v292 = vunpack.c.l.b16 %v284
        %v293 = vunpack.c.l.b16 %v285
        %v294 = vunpack.c.l.b16 %v286
        %v295 = vpack.c.b16 %v292, %v291
        %v296 = vpack.c.b16 %v294, %v293
        %vm299 = vcmask 261120
        %v301 = vsel %vm299, %v282, 0
        %303 = vmatprep.subr.bf16.mxu0 0
        %304 = vmatpush1.bf16.msra.mxu0 0
        %305 = vmatprep.subr.bf16.mxu0 0
        %306 = vmatpush1.bf16.msra.mxu0 0
        %307 = vmatprep.subr.bf16.mxu0 0
        %308 = vmatpush1.bf16.msra.mxu0 0
        %309 = vmatprep.subr.bf16.mxu0 0
        %310 = vmatpush1.bf16.msra.mxu0 0
        %311 = vmatprep.subr.bf16.mxu0 0
        %312 = vmatpush1.bf16.msra.mxu0 0
        %313 = vmatprep.subr.bf16.mxu0 0
        %314 = vmatpush1.bf16.msra.mxu0 0
        %315 = vmatprep.subr.bf16.mxu0 0
        %316 = vmatpush1.bf16.msra.mxu0 %v296
        %317 = vmatprep.subr.bf16.mxu0 0
        %318 = vmatpush1.bf16.msra.mxu0 %v295
        %319 = vmatprep.subr.bf16.mxu0 0
        %320 = vmatpush2.bf16.msra.mxu0 0
        %321 = vmatprep.subr.bf16.mxu0 0
        %322 = vmatpush2.bf16.msra.mxu0 0
        %323 = vmatprep.subr.bf16.mxu0 0
        %324 = vmatpush2.bf16.msra.mxu0 0
        %325 = vmatprep.subr.bf16.mxu0 0
        %326 = vmatpush2.bf16.msra.mxu0 0
        %327 = vmatprep.subr.bf16.mxu0 0
        %328 = vmatpush2.bf16.msra.mxu0 0
        %329 = vmatprep.subr.bf16.mxu0 0
        %330 = vmatpush2.bf16.msra.mxu0 0
        %331 = vmatprep.subr.bf16.mxu0 0
        %332 = vmatpush2.bf16.msra.mxu0 0
        %333 = vmatprep.subr.bf16.mxu0 0
        %334 = vmatpush2.bf16.msra.mxu0 0
        %335 = vmatprep.mubr.bf16.mxu0 0
        %336 = vmatmul.mubr.bf16.gmra.mxu0 %v301
        %v337 = vpop.f32.mrf.mxu0
        %v338 = vadd.f32 0.0, %v337
        %v339 = vpop.f32.mrf.mxu0
        %v340 = vpop.f32.mrf.mxu0
        %v341 = vpop.f32.mrf.mxu0
        %342 = vdwg.mxu0
        %v343 = vld [vmem:[%s276] sm:$0xff]
        %v344 = vmul.f32 %v338, %v343
        %346 = vrot.lane.b32.xlu0 %v338, 120
        %v347 = vpop.permute.xlu0 %346
        %349 = vrot.lane.b32.xlu0 %v338, 8
        %v350 = vpop.permute.xlu0 %349
        %vm352 = vcmask 64512
        %v353 = vsel %vm352, %v347, %v350
        %v354 = vld [vmem:[%s280] sm:$0xff]
        %v355 = vmul.f32 %v353, %v354
        %v356 = vadd.f32 %v344, %v355
        %v357 = vpack.c.bf16 %v356, %v356
        %vm358 = vcmask 125952
        %359 = vst.msk [vmem:[%s260] sm:$0xf] %vm358, %v357
        %s360 = sand.u32 %s155, 1
        %s361 = scalar_lea.sflag [#allocation3], %s360
        %s362 = sand.u32 %s155, 1
        %s363 = smul.addr %s362, 4
        %s364 = scalar_lea.vmem [#allocation2], %s363
        // Predicated region
        $region37: #{tpu_custom_call.1} parent=35 // pred_check
          %p365 = pneg %p165
        $region38: #{tpu_custom_call.1} parent=35 // pred_check_branch
          %367 = sbr.rel (%p365) target = $region40
        $region39: #{tpu_custom_call.1} parent=35 // pred_region
          %s369 = ssub.s32 64, 64
          %370 = vsyncadd %s361, %s369
          %s371 = sadd.s32 %s24, %s25
          %s372 = smul.addr %s23, 2
          %s373 = sadd.s32 %s371, %s372
          %s374 = smul.addr %s373, 64
          %s375 = scalar_lea.hbm %s4, %s374
          %s377 = sshll.u32 %s364, 4
          %s378 = int_to_ptr.vmem [resolvable:$true] %s377
          %380 = dma.vmem_to_hbm [thread:$0]  %s378, 64, %s375, %s361
        $region40: #{tpu_custom_call.1} parent=35 // pred_fallthru
          _
      $region36: #{tpu_custom_call.1} parent=5 // pred_fallthru
        _
      %p381 = scmp.le.s32.totalorder 2, %s13
      // Predicated region
      $region41: #{tpu_custom_call.1} parent=5 // pred_check
        %p382 = pneg %p381
      $region42: #{tpu_custom_call.1} parent=5 // pred_check_branch
        %384 = sbr.rel (%p382) target = $region44
      $region43: #{tpu_custom_call.1} parent=5 // pred_region
        %s385 = ssub.s32 %s13, 2
        // Predicated region
        $region45: #{tpu_custom_call.1} parent=43 // pred_check
          %p386 = pneg %p171
        $region46: #{tpu_custom_call.1} parent=43 // pred_check_branch
          %388 = sbr.rel (%p386) target = $region48
        $region47: #{tpu_custom_call.1} parent=43 // pred_region
          %s389 = sand.u32 %s156, 1
          %s390 = scalar_lea.sflag [#allocation3], %s389
          %s391 = sand.u32 %s156, 1
          %s392 = smul.addr %s391, 4
          %s393 = scalar_lea.vmem [#allocation2], %s392
          %394 = dma.done %s390, 64
        $region48: #{tpu_custom_call.1} parent=43 // pred_fallthru
          _
      $region44: #{tpu_custom_call.1} parent=5 // pred_fallthru
        _
    $region6: #{tpu_custom_call.1} parent=1 // loop_footer
      %s17 = sadd.s32 1, %s13
    $region7: #{tpu_custom_call.1} parent=1 // loop_footer_branch
      %12 = sbr.rel target = $region3
    $region8: #{tpu_custom_call.1} parent=1 // loop_exit
      _
    %395 = vsyncpa [#allocation3], 1
    %s396 = scalar_lea.sflag [#allocation3], 1
    %397 = vsyncpa %s396, 1

</llo_original>
